<compile_context>
chip_gen: v6e
topology: v6e:2x2x1
jax: 0.10.0
libtpu: 0.0.40
codegen_flags: <defaults>
</compile_context>

<pallas_src>
import functools

import jax
import jax.numpy as jnp
from jax.experimental import pallas as pl
from jax.experimental.pallas import tpu as pltpu


def _iou_block_kernel(pred_ref, targ_ref, inter_ref, a_ref, b_ref, *,
                      c, s_rows, ch_rows, n_inner, nb, hw,
                      label_smoothing, masked, has_tail):
    """One grid step: per-channel [sum(p*t), sum(p), sum(t)] over a
    (C, s_rows, 128) pixel block of one batch element.

    pred_ref / targ_ref   : (C, s_rows, 128) VMEM blocks (pixels on sublanes+lanes)
    inter_ref/a_ref/b_ref : (C, 1) partial outputs owned by this grid step
    """
    i = pl.program_id(1)
    ls = float(label_smoothing)

    def chunk_stats(x_raw, t_raw, pix0, apply_tail):
        """Returns (p*t, p, t), each (C, rows, 128), for one row chunk."""
        rows = x_raw.shape[1]
        x = x_raw.astype(jnp.float32)
        t_raw = t_raw.astype(jnp.float32)
        # sigmoid(x) = 0.5*tanh(0.5*x) + 0.5 : one EUP op + two cheap VALU ops.
        p = 0.5 * jnp.tanh(0.5 * x) + 0.5
        if ls:
            t = t_raw * (1.0 - ls) + (ls / c)
        else:
            t = t_raw

        m = None
        if apply_tail:
            # Mask off pixels >= H*W (zero padding + Pallas OOB rows of the last
            # ragged block).  jnp.where, so garbage (even NaN/inf) cannot leak.
            row = jax.lax.broadcasted_iota(jnp.int32, (rows, 128), 0)
            lane = jax.lax.broadcasted_iota(jnp.int32, (rows, 128), 1)
            m = ((pix0 + row * 128 + lane) < hw)[None, :, :]
        if masked:
            # PyTorch semantics: pixel kept iff sum over channels of the *raw*
            # target == 1 (computed in-kernel, no extra HBM mask array).
            valid = jnp.sum(t_raw, axis=0, keepdims=True) == 1.0
            m = valid if m is None else jnp.logical_and(m, valid)
        if m is not None:
            p = jnp.where(m, p, 0.0)
            t = jnp.where(m, t, 0.0)
        return p * t, p, t

    def finalize(v):                       # (C, rows, 128) -> (C, 1)
        return jnp.sum(jnp.sum(v, axis=-1), axis=-1, keepdims=True)

    def run(apply_tail):
        if n_inner == 1:
            pt, p, t = chunk_stats(pred_ref[...], targ_ref[...],
                                   i * (s_rows * 128), apply_tail)
        else:
            def body(j, carry):
                r0 = pl.multiple_of(j * ch_rows, ch_rows)
                d_pt, d_p, d_t = chunk_stats(
                    pred_ref[:, pl.ds(r0, ch_rows), :],
                    targ_ref[:, pl.ds(r0, ch_rows), :],
                    (i * s_rows + r0) * 128, apply_tail)
                return carry[0] + d_pt, carry[1] + d_p, carry[2] + d_t

            z = jnp.zeros((c, ch_rows, 128), jnp.float32)
            pt, p, t = jax.lax.fori_loop(0, n_inner, body, (z, z, z))
        inter_ref[...] = finalize(pt)
        a_ref[...] = finalize(p)
        b_ref[...] = finalize(t)

    if not has_tail:
        run(False)
    elif nb == 1:
        run(True)
    else:
        @pl.when(i < nb - 1)
        def _():
            run(False)

        @pl.when(i == nb - 1)
        def _():
            run(True)


def _choose_rows(n_rows, c, itemsize, target_bytes):
    """Rows per block: multiple of 8 (or the full dim), ~target_bytes per input."""
    if n_rows <= 8:
        return n_rows                      # full second-to-minor dim (allowed)
    rows_target = max(8, target_bytes // (c * 128 * itemsize))
    n_blocks = pl.cdiv(n_rows, rows_target)
    s = pl.cdiv(n_rows, n_blocks)          # balanced rows per block
    s_up = pl.cdiv(s, 8) * 8
    return s_up if s_up <= n_rows else max(8, (s // 8) * 8)


def iou_loss(pred, target, *, smooth=1.0, w=(1.0,), outchannels=1,
             label_smoothing=0.0, masked=False,
             block_bytes_per_input=2 * 1024 * 1024):
    """Pallas implementation of iouloss.forward. pred/target are NCHW."""
    if len(w) != outchannels:
        raise ValueError('Loss weights should be equal to the output channels.')

    B, C, H, W = pred.shape
    assert C == outchannels
    HW = H * W
    n_rows = pl.cdiv(HW, 128)
    HW_pad = n_rows * 128
    assert HW_pad < 2 ** 31                # in-kernel pixel indices are int32

    pred3 = pred.reshape(B, C, HW)
    targ3 = target.reshape(B, C, HW)
    if HW_pad != HW:
        # One extra HBM pass only in the ragged case; the padded (and any OOB)
        # pixels are masked in-kernel on the pl.when-gated last block.
        padw = ((0, 0), (0, 0), (0, HW_pad - HW))
        pred3 = jnp.pad(pred3, padw)
        targ3 = jnp.pad(targ3, padw)
    # Free contiguous view: pixels -> (rows, 128) so they fill sublanes AND lanes.
    pred4 = pred3.reshape(B, C, n_rows, 128)
    targ4 = targ3.reshape(B, C, n_rows, 128)

    itemsize = max(pred.dtype.itemsize, target.dtype.itemsize)
    s_rows = _choose_rows(n_rows, C, itemsize, int(block_bytes_per_input))
    ch_rows = next((k for k in (64, 32, 16, 8) if s_rows % k == 0), s_rows)
    n_inner = s_rows // ch_rows
    nb = pl.cdiv(n_rows, s_rows)
    has_tail = nb * s_rows * 128 > HW

    kernel = functools.partial(
        _iou_block_kernel, c=C, s_rows=s_rows, ch_rows=ch_rows, n_inner=n_inner,
        nb=nb, hw=HW, label_smoothing=float(label_smoothing),
        masked=bool(masked), has_tail=has_tail)

    out_shape = tuple(jax.ShapeDtypeStruct((B, nb, C, 1), jnp.float32)
                      for _ in range(3))
    in_spec = pl.BlockSpec((None, C, s_rows, 128), lambda b, i: (b, 0, i, 0))
    out_spec = pl.BlockSpec((None, None, C, 1), lambda b, i: (b, i, 0, 0))

    inter_p, a_p, b_p = pl.pallas_call(
        kernel,
        out_shape=out_shape,
        grid=(B, nb),
        in_specs=[in_spec, in_spec],
        out_specs=(out_spec, out_spec, out_spec),
        compiler_params=pltpu.CompilerParams(
            dimension_semantics=("parallel", "parallel"),
            vmem_limit_bytes=32 * 1024 * 1024),
    )(pred4, targ4)

    # Tiny (B, nb, C) epilogue in plain JAX.
    inter = jnp.sum(inter_p[..., 0], axis=(0, 1))
    a_sum = jnp.sum(a_p[..., 0], axis=(0, 1))
    b_sum = jnp.sum(b_p[..., 0], axis=(0, 1))
    union = a_sum + b_sum - inter
    iou = 1.0 - (inter + smooth) / (union + smooth)
    return jnp.sum(iou * jnp.asarray(w, jnp.float32))


def iou_loss_ref(pred, target, *, smooth, w, outchannels, label_smoothing, masked):
    """Pure-JAX reference mirroring the PyTorch forward exactly (f32 math)."""
    pred = pred.astype(jnp.float32)
    target = target.astype(jnp.float32)
    if masked:
        mask = jnp.sum(target, axis=1) == 1                      # (B, H, W)
    else:
        mask = jnp.ones((target.shape[0], target.shape[2], target.shape[3]), bool)
    t = target * (1.0 - label_smoothing) + label_smoothing / outchannels
    p = jnp.transpose(jax.nn.sigmoid(pred), (0, 2, 3, 1))        # (B, H, W, C)
    t = jnp.transpose(t, (0, 2, 3, 1))
    m = mask[..., None].astype(jnp.float32)
    inter = jnp.sum(p * t * m, axis=(0, 1, 2))
    a_sum = jnp.sum(p * m, axis=(0, 1, 2))
    b_sum = jnp.sum(t * m, axis=(0, 1, 2))
    union = a_sum + b_sum - inter
    iou = 1.0 - (inter + smooth) / (union + smooth)
    return jnp.sum(iou * jnp.asarray(w, jnp.float32))


if __name__ == "__main__":
    smooth = 1.0
    key = jax.random.PRNGKey(0)
    k1, k2, k3, k4, k5, k6 = jax.random.split(key, 6)

    # --- Test 1: masked=False, label smoothing, H*W a multiple of 128 (no tail).
    outchannels = 4
    w = (1.0, 0.5, 2.0, 0.25)
    B, C, H, W = 2, outchannels, 16, 16
    pred = jax.random.normal(k1, (B, C, H, W), dtype=jnp.float32)
    target = jax.random.bernoulli(k2, 0.5, (B, C, H, W)).astype(jnp.float32)
    loss = jax.block_until_ready(
        iou_loss(pred, target, smooth=smooth, w=w, outchannels=outchannels,
                 label_smoothing=0.1, masked=False))
    ref = iou_loss_ref(pred, target, smooth=smooth, w=w, outchannels=outchannels,
                       label_smoothing=0.1, masked=False)
    assert jnp.allclose(loss, ref, rtol=1e-5, atol=1e-5), (loss, ref)

    # --- Test 2: masked=True + ragged H*W (144): zero pad + pl.when-gated tail
    # mask + in-kernel target-derived pixel mask.
    B2, H2, W2 = 2, 12, 12
    pred2 = jax.random.normal(k3, (B2, C, H2, W2), dtype=jnp.float32)
    labels = jax.random.randint(k4, (B2, H2, W2), 0, outchannels + 1)
    target2 = (labels[:, None, :, :] ==
               jnp.arange(outchannels)[None, :, None, None]).astype(jnp.float32)
    loss2 = jax.block_until_ready(
        iou_loss(pred2, target2, smooth=smooth, w=w, outchannels=outchannels,
                 label_smoothing=0.05, masked=True))
    ref2 = iou_loss_ref(pred2, target2, smooth=smooth, w=w, outchannels=outchannels,
                        label_smoothing=0.05, masked=True)
    assert jnp.allclose(loss2, ref2, rtol=1e-5, atol=1e-5), (loss2, ref2)

    # --- Test 3: bf16 streaming, C=1, multiple row-blocks + inner fori_loop
    # chunks + ragged last row-block (gated tail path with nb > 1).
    B3, C3, H3, W3 = 1, 1, 80, 80
    pred3 = jax.random.normal(k5, (B3, C3, H3, W3),
                              dtype=jnp.float32).astype(jnp.bfloat16)
    target3 = jax.random.bernoulli(k6, 0.3, (B3, C3, H3, W3)).astype(jnp.bfloat16)
    loss3 = jax.block_until_ready(
        iou_loss(pred3, target3, smooth=smooth, w=(1.0,), outchannels=1,
                 label_smoothing=0.0, masked=False))
    ref3 = iou_loss_ref(pred3, target3, smooth=smooth, w=(1.0,), outchannels=1,
                        label_smoothing=0.0, masked=False)
    assert jnp.allclose(loss3, ref3, rtol=1e-4, atol=1e-4), (loss3, ref3)

    print("KERNEL_OK")
</pallas_src>

<mosaic_0001>
module attributes {stable_mosaic.version = 11 : i64} {
  func.func @_iou_block_kernel(%arg0: i32, %arg1: i32, %arg2: memref<1x4x2x128xf32, #tpu.memory_space<vmem>>, %arg3: memref<1x4x2x128xf32, #tpu.memory_space<vmem>>, %arg4: memref<1x1x4x1xf32, #tpu.memory_space<vmem>>, %arg5: memref<1x1x4x1xf32, #tpu.memory_space<vmem>>, %arg6: memref<1x1x4x1xf32, #tpu.memory_space<vmem>>) attributes {dimension_semantics = [#tpu.dimension_semantics<parallel>, #tpu.dimension_semantics<parallel>], iteration_bounds = array<i64: 2, 1>, scalar_prefetch = 0 : i64, scratch_operands = 0 : i64, tpu.core_type = #tpu.core_type<tc>, window_params = [{transform_indices = @transform_0, window_bounds = array<i64: 1, 4, 2, 128>}, {transform_indices = @transform_1, window_bounds = array<i64: 1, 4, 2, 128>}, {transform_indices = @transform_2, window_bounds = array<i64: 1, 1, 4, 1>}, {transform_indices = @transform_3, window_bounds = array<i64: 1, 1, 4, 1>}, {transform_indices = @transform_4, window_bounds = array<i64: 1, 1, 4, 1>}]} {
    %c0 = arith.constant 0 : index
    %c0_0 = arith.constant 0 : index
    %c0_1 = arith.constant 0 : index
    %c0_2 = arith.constant 0 : index
    %0 = vector.load %arg2[%c0, %c0_0, %c0_1, %c0_2] : memref<1x4x2x128xf32, #tpu.memory_space<vmem>>, vector<1x4x2x128xf32>
    %1 = vector.shape_cast %0 : vector<1x4x2x128xf32> to vector<4x2x128xf32>
    %c0_3 = arith.constant 0 : index
    %c0_4 = arith.constant 0 : index
    %c0_5 = arith.constant 0 : index
    %c0_6 = arith.constant 0 : index
    %2 = vector.load %arg3[%c0_3, %c0_4, %c0_5, %c0_6] : memref<1x4x2x128xf32, #tpu.memory_space<vmem>>, vector<1x4x2x128xf32>
    %3 = vector.shape_cast %2 : vector<1x4x2x128xf32> to vector<4x2x128xf32>
    %cst = arith.constant 5.000000e-01 : f32
    %4 = vector.broadcast %cst : f32 to vector<4x2x128xf32>
    %5 = arith.mulf %4, %1 : vector<4x2x128xf32>
    %6 = math.tanh %5 : vector<4x2x128xf32>
    %cst_7 = arith.constant 5.000000e-01 : f32
    %7 = vector.broadcast %cst_7 : f32 to vector<4x2x128xf32>
    %8 = arith.mulf %7, %6 : vector<4x2x128xf32>
    %cst_8 = arith.constant 5.000000e-01 : f32
    %9 = vector.broadcast %cst_8 : f32 to vector<4x2x128xf32>
    %10 = arith.addf %8, %9 : vector<4x2x128xf32>
    %cst_9 = arith.constant 0.899999976 : f32
    %11 = vector.broadcast %cst_9 : f32 to vector<4x2x128xf32>
    %12 = arith.mulf %3, %11 : vector<4x2x128xf32>
    %cst_10 = arith.constant 2.500000e-02 : f32
    %13 = vector.broadcast %cst_10 : f32 to vector<4x2x128xf32>
    %14 = arith.addf %12, %13 : vector<4x2x128xf32>
    %15 = arith.mulf %10, %14 : vector<4x2x128xf32>
    %cst_11 = arith.constant dense<0.000000e+00> : vector<4x2xf32>
    %16 = vector.multi_reduction <add>, %15, %cst_11 [2] : vector<4x2x128xf32> to vector<4x2xf32>
    %cst_12 = arith.constant dense<0.000000e+00> : vector<4xf32>
    %17 = vector.multi_reduction <add>, %16, %cst_12 [1] : vector<4x2xf32> to vector<4xf32>
    %18 = vector.shape_cast %17 : vector<4xf32> to vector<4x1xf32>
    %c0_13 = arith.constant 0 : index
    %c0_14 = arith.constant 0 : index
    %c0_15 = arith.constant 0 : index
    %c0_16 = arith.constant 0 : index
    %19 = vector.load %arg4[%c0_13, %c0_14, %c0_15, %c0_16] : memref<1x1x4x1xf32, #tpu.memory_space<vmem>>, vector<1x1x4x1xf32>
    %20 = vector.shape_cast %19 : vector<1x1x4x1xf32> to vector<4x1xf32>
    %21 = vector.shape_cast %18 : vector<4x1xf32> to vector<1x1x4x1xf32>
    tpu.vector_store %arg4[%c0_13, %c0_14, %c0_15, %c0_16], %21 {strides = array<i32>} : memref<1x1x4x1xf32, #tpu.memory_space<vmem>>, vector<1x1x4x1xf32>,
    %cst_17 = arith.constant dense<0.000000e+00> : vector<4x2xf32>
    %22 = vector.multi_reduction <add>, %10, %cst_17 [2] : vector<4x2x128xf32> to vector<4x2xf32>
    %cst_18 = arith.constant dense<0.000000e+00> : vector<4xf32>
    %23 = vector.multi_reduction <add>, %22, %cst_18 [1] : vector<4x2xf32> to vector<4xf32>
    %24 = vector.shape_cast %23 : vector<4xf32> to vector<4x1xf32>
    %c0_19 = arith.constant 0 : index
    %c0_20 = arith.constant 0 : index
    %c0_21 = arith.constant 0 : index
    %c0_22 = arith.constant 0 : index
    %25 = vector.load %arg5[%c0_19, %c0_20, %c0_21, %c0_22] : memref<1x1x4x1xf32, #tpu.memory_space<vmem>>, vector<1x1x4x1xf32>
    %26 = vector.shape_cast %25 : vector<1x1x4x1xf32> to vector<4x1xf32>
    %27 = vector.shape_cast %24 : vector<4x1xf32> to vector<1x1x4x1xf32>
    tpu.vector_store %arg5[%c0_19, %c0_20, %c0_21, %c0_22], %27 {strides = array<i32>} : memref<1x1x4x1xf32, #tpu.memory_space<vmem>>, vector<1x1x4x1xf32>,
    %cst_23 = arith.constant dense<0.000000e+00> : vector<4x2xf32>
    %28 = vector.multi_reduction <add>, %14, %cst_23 [2] : vector<4x2x128xf32> to vector<4x2xf32>
    %cst_24 = arith.constant dense<0.000000e+00> : vector<4xf32>
    %29 = vector.multi_reduction <add>, %28, %cst_24 [1] : vector<4x2xf32> to vector<4xf32>
    %30 = vector.shape_cast %29 : vector<4xf32> to vector<4x1xf32>
    %c0_25 = arith.constant 0 : index
    %c0_26 = arith.constant 0 : index
    %c0_27 = arith.constant 0 : index
    %c0_28 = arith.constant 0 : index
    %31 = vector.load %arg6[%c0_25, %c0_26, %c0_27, %c0_28] : memref<1x1x4x1xf32, #tpu.memory_space<vmem>>, vector<1x1x4x1xf32>
    %32 = vector.shape_cast %31 : vector<1x1x4x1xf32> to vector<4x1xf32>
    %33 = vector.shape_cast %30 : vector<4x1xf32> to vector<1x1x4x1xf32>
    tpu.vector_store %arg6[%c0_25, %c0_26, %c0_27, %c0_28], %33 {strides = array<i32>} : memref<1x1x4x1xf32, #tpu.memory_space<vmem>>, vector<1x1x4x1xf32>,
    return
  }
  func.func @transform_0(%arg0: i32, %arg1: i32) -> (i32, i32, i32, i32) {
    %c0_i32 = arith.constant 0 : i32
    %c0_i32_0 = arith.constant 0 : i32
    %c0_i32_1 = arith.constant 0 : i32
    return %arg0, %c0_i32, %arg1, %c0_i32_0 : i32, i32, i32, i32
  }
  func.func @transform_1(%arg0: i32, %arg1: i32) -> (i32, i32, i32, i32) {
    %c0_i32 = arith.constant 0 : i32
    %c0_i32_0 = arith.constant 0 : i32
    %c0_i32_1 = arith.constant 0 : i32
    return %arg0, %c0_i32, %arg1, %c0_i32_0 : i32, i32, i32, i32
  }
  func.func @transform_2(%arg0: i32, %arg1: i32) -> (i32, i32, i32, i32) {
    %c0_i32 = arith.constant 0 : i32
    %c0_i32_0 = arith.constant 0 : i32
    %c0_i32_1 = arith.constant 0 : i32
    return %arg0, %arg1, %c0_i32, %c0_i32_0 : i32, i32, i32, i32
  }
  func.func @transform_3(%arg0: i32, %arg1: i32) -> (i32, i32, i32, i32) {
    %c0_i32 = arith.constant 0 : i32
    %c0_i32_0 = arith.constant 0 : i32
    %c0_i32_1 = arith.constant 0 : i32
    return %arg0, %arg1, %c0_i32, %c0_i32_0 : i32, i32, i32, i32
  }
  func.func @transform_4(%arg0: i32, %arg1: i32) -> (i32, i32, i32, i32) {
    %c0_i32 = arith.constant 0 : i32
    %c0_i32_0 = arith.constant 0 : i32
    %c0_i32_1 = arith.constant 0 : i32
    return %arg0, %arg1, %c0_i32, %c0_i32_0 : i32, i32, i32, i32
  }
}

</mosaic_0001>

<llo_original>
// kernel: tpu_custom_call.1
$region0: #{tpu_custom_call.1}
  #allocation0 [shape = 'u32[]', space=smem, size = 0x4, offset = 0x4, fixed_abs, tag = 'smem constant byte address 0x4 - core index']
  #allocation1 [shape = 'u32[144,128]{1,0:T(1,128)}', space=vmem, size = 0x12000, scoped, tag = 'internal scratch']
  %s0 = inlined_call_operand.hbm [shape: f32[2,4,2,128], index: 0, kind: input, shape index: {}]
  %s1 = inlined_call_operand.hbm [shape: f32[2,4,2,128], index: 1, kind: input, shape index: {}]
  %s2 = inlined_call_operand.vmem [shape: f32[2,1,4,1], index: 2, kind: output, shape index: {0}]
  %s3 = inlined_call_operand.vmem [shape: f32[2,1,4,1], index: 3, kind: output, shape index: {1}]
  %s4 = inlined_call_operand.vmem [shape: f32[2,1,4,1], index: 4, kind: output, shape index: {2}]
  %5 = xla_tuple %s2, %s3, %s4
  %s6 = sld [smem:[#allocation0]]
  $region65: #{tpu_custom_call.1} parent=0
    _
  %s8 = ssub.s32 1, %s6
  %s9 = scalar_select 0, %s8, %s6
  $region1: #{tpu_custom_call.1} parent=0
    #allocation2 [shape = 'u8[8192]{0}', space=vmem, size = 0x2000, scoped, tag = 'input window, operand 0']
    #allocation3 [shape = 's32[2]{0}', space=sflag, size = 0x8, scoped, tag = 'scoped memory for tpu_custom_call.1']
    #allocation4 [shape = 'u8[8192]{0}', space=vmem, size = 0x2000, scoped, tag = 'input window, operand 1']
    #allocation5 [shape = 's32[2]{0}', space=sflag, size = 0x8, scoped, tag = 'scoped memory for tpu_custom_call.1']
    %10 = vsyncpa [#allocation3], 0
    %s11 = scalar_lea.sflag [#allocation3], 1
    %12 = vsyncpa %s11, 0
    %13 = vsyncpa [#allocation5], 0
    %s14 = scalar_lea.sflag [#allocation5], 1
    %15 = vsyncpa %s14, 0
    loop: start=0, step=1, limit=4
    $region2: #{tpu_custom_call.1} parent=1 // loop_pre_header
      _
    $region3: #{tpu_custom_call.1} parent=1 // loop_header
      %s17 = sphi 0, %s21
      %p18 = scmp.ge.s32.totalorder %s17, 4
      %s24 = sphi 0, %s36
      %s25 = sphi 0, %s32
      %s26 = sphi 0, %s24
      %s27 = sphi 0, %s25
      %s28 = sphi 0, %s26
      %s29 = sphi 0, %s27
      %s41 = sphi 0, %s43
      %s44 = sphi 0, %s41
      %s45 = sphi 0, %s44
      %s61 = sphi 0, %s45
      %s69 = sphi 0, %s71
      %s72 = sphi 0, %s69
      %s73 = sphi 0, %s72
      %s89 = sphi 0, %s73
      %s97 = sphi 0, %s99
      %s100 = sphi 0, %s97
      %s101 = sphi 0, %s100
      %s117 = sphi 0, %s101
      %s125 = sphi 0, %s127
      %s128 = sphi 0, %s125
      %s129 = sphi 0, %s128
      %s145 = sphi 0, %s129
      %s153 = sphi 0, %s155
      %s156 = sphi 0, %s153
      %s157 = sphi 0, %s156
      %s173 = sphi 0, %s157
    $region4: #{tpu_custom_call.1} parent=1 // loop_header_branch
      %20 = sbr.rel (%p18) target = $region8
    $region5: #{tpu_custom_call.1} parent=1 // loop_body
      %s22 = ssub.s32 %s17, 1
      %s23 = ssub.s32 %s17, 2
      %s30 = sadd.s32 1, %s25
      %p31 = scmp.ge.s32.totalorder %s30, 1
      %s32 = scalar_select %p31, 0, %s30
      %s33 = sadd.s32 1, %s24
      %s34 = scalar_select %p31, %s33, %s24
      %p35 = scmp.ge.s32.totalorder %s34, 2
      %s36 = scalar_select %p35, 0, %s34
      %s37 = ssub.s32 %s24, %s36
      %s38 = ssub.s32 %s25, %s32
      %s39 = sor.u32 %s37, %s38
      %p40 = scmp.eq.s32.totalorder %s39, 0
      %s42 = sadd.s32 %s41, 1
      %s43 = scalar_select %p40, %s41, %s42
      %p46 = pneg %p40
      %p47 = scmp.eq.s32.totalorder %s17, 1
      %p48 = por %p46, %p47
      %p49 = scmp.ne.s32.totalorder %s41, %s44
      %p50 = scmp.eq.s32.totalorder %s17, 0
      %p51 = por %p49, %p50
      %p52 = scmp.ne.s32.totalorder %s41, %s44
      %p53 = scmp.eq.s32.totalorder %s22, 1
      %p54 = por %p52, %p53
      %p55 = scmp.ne.s32.totalorder %s44, %s45
      %p56 = scmp.eq.s32.totalorder %s22, 0
      %p57 = por %p55, %p56
      %p58 = scmp.ne.s32.totalorder %s44, %s45
      %p59 = scmp.eq.s32.totalorder %s23, 1
      %p60 = por %p58, %p59
      %p62 = scmp.ne.s32.totalorder %s45, %s61
      %p63 = scmp.eq.s32.totalorder %s23, 0
      %p64 = por %p62, %p63
      %s65 = ssub.s32 %s24, %s36
      %s66 = ssub.s32 %s25, %s32
      %s67 = sor.u32 %s65, %s66
      %p68 = scmp.eq.s32.totalorder %s67, 0
      %s70 = sadd.s32 %s69, 1
      %s71 = scalar_select %p68, %s69, %s70
      %p74 = pneg %p68
      %p75 = scmp.eq.s32.totalorder %s17, 1
      %p76 = por %p74, %p75
      %p77 = scmp.ne.s32.totalorder %s69, %s72
      %p78 = scmp.eq.s32.totalorder %s17, 0
      %p79 = por %p77, %p78
      %p80 = scmp.ne.s32.totalorder %s69, %s72
      %p81 = scmp.eq.s32.totalorder %s22, 1
      %p82 = por %p80, %p81
      %p83 = scmp.ne.s32.totalorder %s72, %s73
      %p84 = scmp.eq.s32.totalorder %s22, 0
      %p85 = por %p83, %p84
      %p86 = scmp.ne.s32.totalorder %s72, %s73
      %p87 = scmp.eq.s32.totalorder %s23, 1
      %p88 = por %p86, %p87
      %p90 = scmp.ne.s32.totalorder %s73, %s89
      %p91 = scmp.eq.s32.totalorder %s23, 0
      %p92 = por %p90, %p91
      %s93 = ssub.s32 %s24, %s36
      %s94 = ssub.s32 %s25, %s32
      %s95 = sor.u32 %s93, %s94
      %p96 = scmp.eq.s32.totalorder %s95, 0
      %s98 = sadd.s32 %s97, 1
      %s99 = scalar_select %p96, %s97, %s98
      %p102 = pneg %p96
      %p103 = scmp.eq.s32.totalorder %s17, 1
      %p104 = por %p102, %p103
      %p105 = scmp.ne.s32.totalorder %s97, %s100
      %p106 = scmp.eq.s32.totalorder %s17, 0
      %p107 = por %p105, %p106
      %p108 = scmp.ne.s32.totalorder %s97, %s100
      %p109 = scmp.eq.s32.totalorder %s22, 1
      %p110 = por %p108, %p109
      %p111 = scmp.ne.s32.totalorder %s100, %s101
      %p112 = scmp.eq.s32.totalorder %s22, 0
      %p113 = por %p111, %p112
      %p114 = scmp.ne.s32.totalorder %s100, %s101
      %p115 = scmp.eq.s32.totalorder %s23, 1
      %p116 = por %p114, %p115
      %p118 = scmp.ne.s32.totalorder %s101, %s117
      %p119 = scmp.eq.s32.totalorder %s23, 0
      %p120 = por %p118, %p119
      %s121 = ssub.s32 %s24, %s36
      %s122 = ssub.s32 %s25, %s32
      %s123 = sor.u32 %s121, %s122
      %p124 = scmp.eq.s32.totalorder %s123, 0
      %s126 = sadd.s32 %s125, 1
      %s127 = scalar_select %p124, %s125, %s126
      %p130 = pneg %p124
      %p131 = scmp.eq.s32.totalorder %s17, 1
      %p132 = por %p130, %p131
      %p133 = scmp.ne.s32.totalorder %s125, %s128
      %p134 = scmp.eq.s32.totalorder %s17, 0
      %p135 = por %p133, %p134
      %p136 = scmp.ne.s32.totalorder %s125, %s128
      %p137 = scmp.eq.s32.totalorder %s22, 1
      %p138 = por %p136, %p137
      %p139 = scmp.ne.s32.totalorder %s128, %s129
      %p140 = scmp.eq.s32.totalorder %s22, 0
      %p141 = por %p139, %p140
      %p142 = scmp.ne.s32.totalorder %s128, %s129
      %p143 = scmp.eq.s32.totalorder %s23, 1
      %p144 = por %p142, %p143
      %p146 = scmp.ne.s32.totalorder %s129, %s145
      %p147 = scmp.eq.s32.totalorder %s23, 0
      %p148 = por %p146, %p147
      %s149 = ssub.s32 %s24, %s36
      %s150 = ssub.s32 %s25, %s32
      %s151 = sor.u32 %s149, %s150
      %p152 = scmp.eq.s32.totalorder %s151, 0
      %s154 = sadd.s32 %s153, 1
      %s155 = scalar_select %p152, %s153, %s154
      %p158 = pneg %p152
      %p159 = scmp.eq.s32.totalorder %s17, 1
      %p160 = por %p158, %p159
      %p161 = scmp.ne.s32.totalorder %s153, %s156
      %p162 = scmp.eq.s32.totalorder %s17, 0
      %p163 = por %p161, %p162
      %p164 = scmp.ne.s32.totalorder %s153, %s156
      %p165 = scmp.eq.s32.totalorder %s22, 1
      %p166 = por %p164, %p165
      %p167 = scmp.ne.s32.totalorder %s156, %s157
      %p168 = scmp.eq.s32.totalorder %s22, 0
      %p169 = por %p167, %p168
      %p170 = scmp.ne.s32.totalorder %s156, %s157
      %p171 = scmp.eq.s32.totalorder %s23, 1
      %p172 = por %p170, %p171
      %p174 = scmp.ne.s32.totalorder %s157, %s173
      %p175 = scmp.eq.s32.totalorder %s23, 0
      %p176 = por %p174, %p175
      %p177 = scmp.le.s32.totalorder 1, %s17
      %p178 = scmp.lt.s32.totalorder %s17, 3
      %p179 = pnand %p177, %p178
      %p180 = pneg %p179
      // Predicated region
      $region9: #{tpu_custom_call.1} parent=5 // pred_check
        _
      $region10: #{tpu_custom_call.1} parent=5 // pred_check_branch
        %182 = sbr.rel (%p179) target = $region12
      $region11: #{tpu_custom_call.1} parent=5 // pred_region
        %s183 = ssub.s32 %s17, 1
      $region12: #{tpu_custom_call.1} parent=5 // pred_fallthru
        _
      %p184 = scmp.lt.s32.totalorder %s17, 2
      // Predicated region
      $region13: #{tpu_custom_call.1} parent=5 // pred_check
        %p185 = pneg %p184
      $region14: #{tpu_custom_call.1} parent=5 // pred_check_branch
        %187 = sbr.rel (%p185) target = $region16
      $region15: #{tpu_custom_call.1} parent=5 // pred_region
        // Predicated region
        $region17: #{tpu_custom_call.1} parent=15 // pred_check
          %p188 = pneg %p51
        $region18: #{tpu_custom_call.1} parent=15 // pred_check_branch
          %190 = sbr.rel (%p188) target = $region20
        $region19: #{tpu_custom_call.1} parent=15 // pred_region
          %s191 = sand.u32 %s41, 1
          %s192 = scalar_lea.sflag [#allocation3], %s191
          %s193 = sand.u32 %s41, 1
          %s194 = smul.addr %s193, 8
          %s195 = scalar_lea.vmem [#allocation2], %s194
          %s197 = ssub.s32 128, 128
          %198 = vsyncadd %s192, %s197
          %s199 = smul.addr %s24, 4
          %s200 = sadd.s32 %s25, %s199
          %s201 = smul.addr %s200, 32
          %s202 = scalar_lea.hbm %s0, %s201
          %s203 = sshll.u32 %s195, 4
          %s204 = int_to_ptr.vmem [resolvable:$true] %s203
          %209 = dma.hbm_to_vmem [thread:$0]  %s202, 128, %s204, %s192, 32, 32, 2
        $region20: #{tpu_custom_call.1} parent=15 // pred_fallthru
          _
        // Predicated region
        $region21: #{tpu_custom_call.1} parent=15 // pred_check
          %p210 = pneg %p79
        $region22: #{tpu_custom_call.1} parent=15 // pred_check_branch
          %212 = sbr.rel (%p210) target = $region24
        $region23: #{tpu_custom_call.1} parent=15 // pred_region
          %s213 = sand.u32 %s69, 1
          %s214 = scalar_lea.sflag [#allocation5], %s213
          %s215 = sand.u32 %s69, 1
          %s216 = smul.addr %s215, 8
          %s217 = scalar_lea.vmem [#allocation4], %s216
          %s219 = ssub.s32 128, 128
          %220 = vsyncadd %s214, %s219
          %s221 = smul.addr %s24, 4
          %s222 = sadd.s32 %s25, %s221
          %s223 = smul.addr %s222, 32
          %s224 = scalar_lea.hbm %s1, %s223
          %s225 = sshll.u32 %s217, 4
          %s226 = int_to_ptr.vmem [resolvable:$true] %s225
          %231 = dma.hbm_to_vmem [thread:$0]  %s224, 128, %s226, %s214, 32, 32, 2
        $region24: #{tpu_custom_call.1} parent=15 // pred_fallthru
          _
      $region16: #{tpu_custom_call.1} parent=5 // pred_fallthru
        _
      %p232 = scmp.le.s32.totalorder 1, %s17
      %p233 = scmp.lt.s32.totalorder %s17, 3
      %p234 = pnand %p232, %p233
      %p235 = pneg %p234
      // Predicated region
      $region25: #{tpu_custom_call.1} parent=5 // pred_check
        _
      $region26: #{tpu_custom_call.1} parent=5 // pred_check_branch
        %237 = sbr.rel (%p234) target = $region28
      $region27: #{tpu_custom_call.1} parent=5 // pred_region
        %s238 = ssub.s32 %s17, 1
        %s239 = sand.u32 %s44, 1
        %s240 = scalar_lea.sflag [#allocation3], %s239
        %s241 = sand.u32 %s44, 1
        %s242 = smul.addr %s241, 8
        %s243 = scalar_lea.vmem [#allocation2], %s242
        // Predicated region
        $region29: #{tpu_custom_call.1} parent=27 // pred_check
          %p244 = pneg %p57
        $region30: #{tpu_custom_call.1} parent=27 // pred_check_branch
          %246 = sbr.rel (%p244) target = $region32
        $region31: #{tpu_custom_call.1} parent=27 // pred_region
          %247 = dma.done %s240, 128
        $region32: #{tpu_custom_call.1} parent=27 // pred_fallthru
          _
        %s248 = sand.u32 %s72, 1
        %s249 = scalar_lea.sflag [#allocation5], %s248
        %s250 = sand.u32 %s72, 1
        %s251 = smul.addr %s250, 8
        %s252 = scalar_lea.vmem [#allocation4], %s251
        // Predicated region
        $region33: #{tpu_custom_call.1} parent=27 // pred_check
          %p253 = pneg %p85
        $region34: #{tpu_custom_call.1} parent=27 // pred_check_branch
          %255 = sbr.rel (%p253) target = $region36
        $region35: #{tpu_custom_call.1} parent=27 // pred_region
          %256 = dma.done %s249, 128
        $region36: #{tpu_custom_call.1} parent=27 // pred_fallthru
          _
        %s257 = sand.u32 %s44, 1
        %s258 = scalar_lea.sflag [#allocation3], %s257
        %s259 = sand.u32 %s44, 1
        %s260 = smul.addr %s259, 8
        %s261 = scalar_lea.vmem [#allocation2], %s260
        %p262 = pneg %p57
        %p263 = pneg %p54
        %s264 = sand.u32 %s72, 1
        %s265 = scalar_lea.sflag [#allocation5], %s264
        %s266 = sand.u32 %s72, 1
        %s267 = smul.addr %s266, 8
        %s268 = scalar_lea.vmem [#allocation4], %s267
        %p269 = pneg %p85
        %p270 = pneg %p82
        %p271 = pneg %p113
        %p272 = pneg %p110
        %p273 = scmp.lt.s32.totalorder %s26, 1
        %s274 = scalar_select %p273, %s26, 1
        %p275 = scmp.lt.s32.totalorder %s27, 0
        %s276 = scalar_select %p275, %s27, 0
        %s277 = sadd.s32 %s276, %s274
        %s278 = smul.addr %s277, 4
        %s279 = scalar_lea.vmem %s2, %s278
        %p280 = pneg %p141
        %p281 = pneg %p138
        %p282 = scmp.lt.s32.totalorder %s26, 1
        %s283 = scalar_select %p282, %s26, 1
        %p284 = scmp.lt.s32.totalorder %s27, 0
        %s285 = scalar_select %p284, %s27, 0
        %s286 = sadd.s32 %s285, %s283
        %s287 = smul.addr %s286, 4
        %s288 = scalar_lea.vmem %s3, %s287
        %p289 = pneg %p169
        %p290 = pneg %p166
        %p291 = scmp.lt.s32.totalorder %s26, 1
        %s292 = scalar_select %p291, %s26, 1
        %p293 = scmp.lt.s32.totalorder %s27, 0
        %s294 = scalar_select %p293, %s27, 0
        %s295 = sadd.s32 %s294, %s292
        %s296 = smul.addr %s295, 4
        %s297 = scalar_lea.vmem %s4, %s296
        %p298 = scmp.lt.s32.totalorder %s26, 1
        %s299 = scalar_select %p298, %s26, 1
        %p300 = scmp.lt.s32.totalorder %s27, 0
        %s301 = scalar_select %p300, %s27, 0
        %s302 = sadd.s32 %s301, %s299
        %s303 = smul.addr %s302, 4
        %s304 = scalar_lea.vmem %s2, %s303
        %p305 = scmp.lt.s32.totalorder %s26, 1
        %s306 = scalar_select %p305, %s26, 1
        %p307 = scmp.lt.s32.totalorder %s27, 0
        %s308 = scalar_select %p307, %s27, 0
        %s309 = sadd.s32 %s308, %s306
        %s310 = smul.addr %s309, 4
        %s311 = scalar_lea.vmem %s3, %s310
        %p312 = scmp.lt.s32.totalorder %s26, 1
        %s313 = scalar_select %p312, %s26, 1
        %p314 = scmp.lt.s32.totalorder %s27, 0
        %s315 = scalar_select %p314, %s27, 0
        %s316 = sadd.s32 %s315, %s313
        %s317 = smul.addr %s316, 4
        %s318 = scalar_lea.vmem %s4, %s317
        %v319 = vld [vmem:[%s243] sm:$0x3]
        %v320 = vld [vmem:[%s243 + $0x2] sm:$0x3]
        %v321 = vld [vmem:[%s243 + $0x4] sm:$0x3]
        %v322 = vld [vmem:[%s243 + $0x6] sm:$0x3]
        %v323 = vld [vmem:[%s252] sm:$0x3]
        %v324 = vld [vmem:[%s252 + $0x2] sm:$0x3]
        %v325 = vld [vmem:[%s252 + $0x4] sm:$0x3]
        %v326 = vld [vmem:[%s252 + $0x6] sm:$0x3]
        %v327 = vmul.f32 %v319, 0.5
        %v328 = vmul.f32 %v320, 0.5
        %v329 = vmul.f32 %v321, 0.5
        %v330 = vmul.f32 %v322, 0.5
        %v331 = vtanh.pop %v327
        %v332 = vtanh.pop %v328
        %v333 = vtanh.pop %v329
        %v334 = vtanh.pop %v330
        %v335 = vmul.f32 %v331, 0.5
        %v336 = vmul.f32 %v332, 0.5
        %v337 = vmul.f32 %v333, 0.5
        %v338 = vmul.f32 %v334, 0.5
        %v339 = vadd.f32 %v335, 0.5
        %v340 = vadd.f32 %v336, 0.5
        %v341 = vadd.f32 %v337, 0.5
        %v342 = vadd.f32 %v338, 0.5
        %v343 = vmul.f32 %v323, 0.9
        %v344 = vmul.f32 %v324, 0.9
        %v345 = vmul.f32 %v325, 0.9
        %v346 = vmul.f32 %v326, 0.9
        %v347 = vadd.f32 %v343, 0.025
        %v348 = vadd.f32 %v344, 0.025
        %v349 = vadd.f32 %v345, 0.025
        %v350 = vadd.f32 %v346, 0.025
        %v351 = vmul.f32 %v339, %v347
        %v352 = vmul.f32 %v340, %v348
        %v353 = vmul.f32 %v341, %v349
        %v354 = vmul.f32 %v342, %v350
        %vm355 = vcmask 1041408
        %v356 = vsel %vm355, %v351, 0.0
        %357 = vadd.xlane.f32.xlu0 %v356
        %v358 = vpop.xlane.xlu0 %357
        %v359 = vsel %vm355, %v352, 0.0
        %360 = vadd.xlane.f32.xlu0 %v359
        %v361 = vpop.xlane.xlu0 %360
        %v362 = vsel %vm355, %v353, 0.0
        %363 = vadd.xlane.f32.xlu0 %v362
        %v364 = vpop.xlane.xlu0 %363
        %v365 = vsel %vm355, %v354, 0.0
        %366 = vadd.xlane.f32.xlu0 %v365
        %v367 = vpop.xlane.xlu0 %366
        %v372 = vlaneseq
        %v373 = vand.u32 %v372, 127
        %v374 = vlaneseq
        %v375 = vshrl.u32 %v374, 7
        %v376 = vsub.s32 %v373, %v375
        %v377 = vrot.slane %v358, %v376
        %v378 = vlaneseq
        %v379 = vshrl.u32 %v378, 7
        %v380 = vsub.s32 %v373, %v379
        %v381 = vrot.slane %v361, %v380
        %v382 = vlaneseq
        %v383 = vshrl.u32 %v382, 7
        %v384 = vsub.s32 %v373, %v383
        %v385 = vrot.slane %v364, %v384
        %v386 = vlaneseq
        %v387 = vshrl.u32 %v386, 7
        %v388 = vsub.s32 %v373, %v387
        %v389 = vrot.slane %v367, %v388
        %vm390 = vcmask 1041409
        %v391 = vsel %vm390, %v381, %v377
        %vm392 = vcmask 1042434
        %v393 = vsel %vm392, %v385, %v391
        %vm394 = vcmask 1043459
        %v395 = vsel %vm394, %v389, %v393
        %vm397 = vcmask 11264
        %v398 = vsel %vm397, %v395, 0.0
        %399 = vadd.xlane.f32.xlu0 %v398
        %v400 = vpop.xlane.xlu0 %399
        %vm401 = vcmask 3072
        %402 = vst.msk [vmem:[%s304] sm:$0xf] %vm401, %v400
        %v403 = vsel %vm355, %v339, 0.0
        %404 = vadd.xlane.f32.xlu0 %v403
        %v405 = vpop.xlane.xlu0 %404
        %v406 = vsel %vm355, %v340, 0.0
        %407 = vadd.xlane.f32.xlu0 %v406
        %v408 = vpop.xlane.xlu0 %407
        %v409 = vsel %vm355, %v341, 0.0
        %410 = vadd.xlane.f32.xlu0 %v409
        %v411 = vpop.xlane.xlu0 %410
        %v412 = vsel %vm355, %v342, 0.0
        %413 = vadd.xlane.f32.xlu0 %v412
        %v414 = vpop.xlane.xlu0 %413
        %v419 = vlaneseq
        %v420 = vshrl.u32 %v419, 7
        %v421 = vsub.s32 %v373, %v420
        %v422 = vrot.slane %v405, %v421
        %v423 = vlaneseq
        %v424 = vshrl.u32 %v423, 7
        %v425 = vsub.s32 %v373, %v424
        %v426 = vrot.slane %v408, %v425
        %v427 = vlaneseq
        %v428 = vshrl.u32 %v427, 7
        %v429 = vsub.s32 %v373, %v428
        %v430 = vrot.slane %v411, %v429
        %v431 = vlaneseq
        %v432 = vshrl.u32 %v431, 7
        %v433 = vsub.s32 %v373, %v432
        %v434 = vrot.slane %v414, %v433
        %v435 = vsel %vm390, %v426, %v422
        %v436 = vsel %vm392, %v430, %v435
        %v437 = vsel %vm394, %v434, %v436
        %v439 = vsel %vm397, %v437, 0.0
        %440 = vadd.xlane.f32.xlu0 %v439
        %v441 = vpop.xlane.xlu0 %440
        %442 = vst.msk [vmem:[%s311] sm:$0xf] %vm401, %v441
        %v443 = vsel %vm355, %v347, 0.0
        %444 = vadd.xlane.f32.xlu0 %v443
        %v445 = vpop.xlane.xlu0 %444
        %v446 = vsel %vm355, %v348, 0.0
        %447 = vadd.xlane.f32.xlu0 %v446
        %v448 = vpop.xlane.xlu0 %447
        %v449 = vsel %vm355, %v349, 0.0
        %450 = vadd.xlane.f32.xlu0 %v449
        %v451 = vpop.xlane.xlu0 %450
        %v452 = vsel %vm355, %v350, 0.0
        %453 = vadd.xlane.f32.xlu0 %v452
        %v454 = vpop.xlane.xlu0 %453
        %v459 = vlaneseq
        %v460 = vshrl.u32 %v459, 7
        %v461 = vsub.s32 %v373, %v460
        %v462 = vrot.slane %v445, %v461
        %v463 = vlaneseq
        %v464 = vshrl.u32 %v463, 7
        %v465 = vsub.s32 %v373, %v464
        %v466 = vrot.slane %v448, %v465
        %v467 = vlaneseq
        %v468 = vshrl.u32 %v467, 7
        %v469 = vsub.s32 %v373, %v468
        %v470 = vrot.slane %v451, %v469
        %v471 = vlaneseq
        %v472 = vshrl.u32 %v471, 7
        %v473 = vsub.s32 %v373, %v472
        %v474 = vrot.slane %v454, %v473
        %v475 = vsel %vm390, %v466, %v462
        %v476 = vsel %vm392, %v470, %v475
        %v477 = vsel %vm394, %v474, %v476
        %v479 = vsel %vm397, %v477, 0.0
        %480 = vadd.xlane.f32.xlu0 %v479
        %v481 = vpop.xlane.xlu0 %480
        %482 = vst.msk [vmem:[%s318] sm:$0xf] %vm401, %v481
        %p483 = scmp.lt.s32.totalorder %s26, 1
        %s484 = scalar_select %p483, %s26, 1
        %p485 = scmp.lt.s32.totalorder %s27, 0
        %s486 = scalar_select %p485, %s27, 0
        %s487 = sadd.s32 %s486, %s484
        %s488 = smul.addr %s487, 4
        %s489 = scalar_lea.vmem %s2, %s488
        %p490 = scmp.lt.s32.totalorder %s26, 1
        %s491 = scalar_select %p490, %s26, 1
        %p492 = scmp.lt.s32.totalorder %s27, 0
        %s493 = scalar_select %p492, %s27, 0
        %s494 = sadd.s32 %s493, %s491
        %s495 = smul.addr %s494, 4
        %s496 = scalar_lea.vmem %s3, %s495
        %p497 = scmp.lt.s32.totalorder %s26, 1
        %s498 = scalar_select %p497, %s26, 1
        %p499 = scmp.lt.s32.totalorder %s27, 0
        %s500 = scalar_select %p499, %s27, 0
        %s501 = sadd.s32 %s500, %s498
        %s502 = smul.addr %s501, 4
        %s503 = scalar_lea.vmem %s4, %s502
        // Predicated region
        $region37: #{tpu_custom_call.1} parent=27 // pred_check
          %p504 = pneg %p110
        $region38: #{tpu_custom_call.1} parent=27 // pred_check_branch
          %506 = sbr.rel (%p504) target = $region40
        $region39: #{tpu_custom_call.1} parent=27 // pred_region
          _
        $region40: #{tpu_custom_call.1} parent=27 // pred_fallthru
          _
        // Predicated region
        $region41: #{tpu_custom_call.1} parent=27 // pred_check
          %p507 = pneg %p138
        $region42: #{tpu_custom_call.1} parent=27 // pred_check_branch
          %509 = sbr.rel (%p507) target = $region44
        $region43: #{tpu_custom_call.1} parent=27 // pred_region
          _
        $region44: #{tpu_custom_call.1} parent=27 // pred_fallthru
          _
        // Predicated region
        $region45: #{tpu_custom_call.1} parent=27 // pred_check
          %p510 = pneg %p166
        $region46: #{tpu_custom_call.1} parent=27 // pred_check_branch
          %512 = sbr.rel (%p510) target = $region48
        $region47: #{tpu_custom_call.1} parent=27 // pred_region
          _
        $region48: #{tpu_custom_call.1} parent=27 // pred_fallthru
          _
      $region28: #{tpu_custom_call.1} parent=5 // pred_fallthru
        _
      %p513 = scmp.le.s32.totalorder 2, %s17
      // Predicated region
      $region49: #{tpu_custom_call.1} parent=5 // pred_check
        %p514 = pneg %p513
      $region50: #{tpu_custom_call.1} parent=5 // pred_check_branch
        %516 = sbr.rel (%p514) target = $region52
      $region51: #{tpu_custom_call.1} parent=5 // pred_region
        %s517 = ssub.s32 %s17, 2
        // Predicated region
        $region53: #{tpu_custom_call.1} parent=51 // pred_check
          %p518 = pneg %p116
        $region54: #{tpu_custom_call.1} parent=51 // pred_check_branch
          %520 = sbr.rel (%p518) target = $region56
        $region55: #{tpu_custom_call.1} parent=51 // pred_region
          %p521 = scmp.lt.s32.totalorder %s28, 1
          %s522 = scalar_select %p521, %s28, 1
          %p523 = scmp.lt.s32.totalorder %s29, 0
          %s524 = scalar_select %p523, %s29, 0
          %s525 = sadd.s32 %s524, %s522
          %s526 = smul.addr %s525, 4
          %s527 = scalar_lea.vmem %s2, %s526
        $region56: #{tpu_custom_call.1} parent=51 // pred_fallthru
          _
        // Predicated region
        $region57: #{tpu_custom_call.1} parent=51 // pred_check
          %p528 = pneg %p144
        $region58: #{tpu_custom_call.1} parent=51 // pred_check_branch
          %530 = sbr.rel (%p528) target = $region60
        $region59: #{tpu_custom_call.1} parent=51 // pred_region
          %p531 = scmp.lt.s32.totalorder %s28, 1
          %s532 = scalar_select %p531, %s28, 1
          %p533 = scmp.lt.s32.totalorder %s29, 0
          %s534 = scalar_select %p533, %s29, 0
          %s535 = sadd.s32 %s534, %s532
          %s536 = smul.addr %s535, 4
          %s537 = scalar_lea.vmem %s3, %s536
        $region60: #{tpu_custom_call.1} parent=51 // pred_fallthru
          _
        // Predicated region
        $region61: #{tpu_custom_call.1} parent=51 // pred_check
          %p538 = pneg %p172
        $region62: #{tpu_custom_call.1} parent=51 // pred_check_branch
          %540 = sbr.rel (%p538) target = $region64
        $region63: #{tpu_custom_call.1} parent=51 // pred_region
          %p541 = scmp.lt.s32.totalorder %s28, 1
          %s542 = scalar_select %p541, %s28, 1
          %p543 = scmp.lt.s32.totalorder %s29, 0
          %s544 = scalar_select %p543, %s29, 0
          %s545 = sadd.s32 %s544, %s542
          %s546 = smul.addr %s545, 4
          %s547 = scalar_lea.vmem %s4, %s546
        $region64: #{tpu_custom_call.1} parent=51 // pred_fallthru
          _
      $region52: #{tpu_custom_call.1} parent=5 // pred_fallthru
        _
    $region6: #{tpu_custom_call.1} parent=1 // loop_footer
      %s21 = sadd.s32 1, %s17
    $region7: #{tpu_custom_call.1} parent=1 // loop_footer_branch
      %16 = sbr.rel target = $region3
    $region8: #{tpu_custom_call.1} parent=1 // loop_exit
      _
    %548 = vsyncpa [#allocation3], 1
    %s549 = scalar_lea.sflag [#allocation3], 1
    %550 = vsyncpa %s549, 1
    %551 = vsyncpa [#allocation5], 1
    %s552 = scalar_lea.sflag [#allocation5], 1
    %553 = vsyncpa %s552, 1

</llo_original>
